<compile_context>
chip_gen: v7x
topology: tpu7x:2x2x1
jax: 0.10.0
libtpu: 0.0.40
codegen_flags: <defaults>
</compile_context>

<pallas_src>
import jax
import jax.numpy as jnp
from jax.experimental import pallas as pl
from jax.experimental.pallas import tpu as pltpu


def _flatten_copy_kernel(x1_hbm, x2_hbm, o1_hbm, o2_hbm, sem):
    # Direct HBM->HBM DMA for both tensors; overlap the two copies.
    cp1 = pltpu.make_async_copy(x1_hbm, o1_hbm, sem.at[0])
    cp2 = pltpu.make_async_copy(x2_hbm, o2_hbm, sem.at[1])
    cp1.start()
    cp2.start()
    cp1.wait()
    cp2.wait()


def naive_model_forward(input_1, input_2):
    """Equivalent of Model.forward: (flatten(input_1), flatten(input_2))."""
    assert input_1.shape == input_2.shape
    assert input_1.dtype == input_2.dtype
    N = input_1.shape[0]
    D = 1
    for s in input_1.shape[1:]:
        D *= s
    dtype = input_1.dtype

    # Free, metadata-only collapse to the (N, C*T*V*M) output layout.
    x1 = input_1.reshape(N, D)
    x2 = input_2.reshape(N, D)

    hbm_spec = pl.BlockSpec(memory_space=pl.ANY)

    f = pl.pallas_call(
        _flatten_copy_kernel,
        out_shape=(
            jax.ShapeDtypeStruct((N, D), dtype),
            jax.ShapeDtypeStruct((N, D), dtype),
        ),
        in_specs=[hbm_spec, hbm_spec],
        out_specs=(hbm_spec, hbm_spec),
        scratch_shapes=[pltpu.SemaphoreType.DMA((2,))],
    )
    y1, y2 = f(x1, x2)
    return y1, y2


# TODO(synk): the original class accepts in_channels / num_class / graph_args /
# edge_importance_weighting but creates no parameters and never uses them in
# forward, so no weights are initialized here.


if __name__ == "__main__":
    key = jax.random.PRNGKey(0)
    k1, k2 = jax.random.split(key)

    # Small shapes consistent with (N, C, T, V, M): batch=2, channels=4,
    # frames=8, graph nodes=16, persons=2  ->  flattened dim = 1024.
    N, C, T, V, M = 2, 4, 8, 16, 2
    x1 = jax.random.normal(k1, (N, C, T, V, M), dtype=jnp.float32)
    x2 = jax.random.normal(k2, (N, C, T, V, M), dtype=jnp.float32)

    f1, f2 = naive_model_forward(x1, x2)
    jax.block_until_ready((f1, f2))

    # Cross-check against the reference semantics (torch .view == row-major reshape).
    ref1 = x1.reshape(N, -1)
    ref2 = x2.reshape(N, -1)
    assert f1.shape == (N, C * T * V * M) and f2.shape == (N, C * T * V * M)
    assert jnp.array_equal(f1, ref1) and jnp.array_equal(f2, ref2)

    print("KERNEL_OK")
</pallas_src>

<mosaic_0001>
module attributes {stable_mosaic.version = 11 : i64} {
  func.func @_flatten_copy_kernel(%arg0: memref<2x1024xf32, #tpu.memory_space<any>>, %arg1: memref<2x1024xf32, #tpu.memory_space<any>>, %arg2: memref<2x1024xf32, #tpu.memory_space<any>>, %arg3: memref<2x1024xf32, #tpu.memory_space<any>>, %arg4: memref<2x!tpu.dma_semaphore, #tpu.memory_space<semaphore_mem>>) attributes {dimension_semantics = [], scalar_prefetch = 0 : i64, scratch_operands = 1 : i64, tpu.core_type = #tpu.core_type<tc>} {
    %c0_i32 = arith.constant 0 : i32
    %0 = tpu.memref_slice %arg4[%c0_i32] : memref<2x!tpu.dma_semaphore, #tpu.memory_space<semaphore_mem>> -> memref<1x!tpu.dma_semaphore, #tpu.memory_space<semaphore_mem>>
    %1 = tpu.memref_squeeze %0 : memref<1x!tpu.dma_semaphore, #tpu.memory_space<semaphore_mem>> -> memref<!tpu.dma_semaphore, #tpu.memory_space<semaphore_mem>>
    tpu.enqueue_dma source(%arg0 : memref<2x1024xf32, #tpu.memory_space<any>>) target(%arg2 : memref<2x1024xf32, #tpu.memory_space<any>>) target_semaphore(%1 : memref<!tpu.dma_semaphore, #tpu.memory_space<semaphore_mem>>)
    %c1_i32 = arith.constant 1 : i32
    %2 = tpu.memref_slice %arg4[%c1_i32] : memref<2x!tpu.dma_semaphore, #tpu.memory_space<semaphore_mem>> -> memref<1x!tpu.dma_semaphore, #tpu.memory_space<semaphore_mem>>
    %3 = tpu.memref_squeeze %2 : memref<1x!tpu.dma_semaphore, #tpu.memory_space<semaphore_mem>> -> memref<!tpu.dma_semaphore, #tpu.memory_space<semaphore_mem>>
    tpu.enqueue_dma source(%arg1 : memref<2x1024xf32, #tpu.memory_space<any>>) target(%arg3 : memref<2x1024xf32, #tpu.memory_space<any>>) target_semaphore(%3 : memref<!tpu.dma_semaphore, #tpu.memory_space<semaphore_mem>>)
    %c0_i32_0 = arith.constant 0 : i32
    %4 = tpu.memref_slice %arg4[%c0_i32_0] : memref<2x!tpu.dma_semaphore, #tpu.memory_space<semaphore_mem>> -> memref<1x!tpu.dma_semaphore, #tpu.memory_space<semaphore_mem>>
    %5 = tpu.memref_squeeze %4 : memref<1x!tpu.dma_semaphore, #tpu.memory_space<semaphore_mem>> -> memref<!tpu.dma_semaphore, #tpu.memory_space<semaphore_mem>>
    tpu.wait_dma2 semaphore(%5 : memref<!tpu.dma_semaphore, #tpu.memory_space<semaphore_mem>>) src(%arg0 : memref<2x1024xf32, #tpu.memory_space<any>>) dst(%arg2 : memref<2x1024xf32, #tpu.memory_space<any>>)
    %c1_i32_1 = arith.constant 1 : i32
    %6 = tpu.memref_slice %arg4[%c1_i32_1] : memref<2x!tpu.dma_semaphore, #tpu.memory_space<semaphore_mem>> -> memref<1x!tpu.dma_semaphore, #tpu.memory_space<semaphore_mem>>
    %7 = tpu.memref_squeeze %6 : memref<1x!tpu.dma_semaphore, #tpu.memory_space<semaphore_mem>> -> memref<!tpu.dma_semaphore, #tpu.memory_space<semaphore_mem>>
    tpu.wait_dma2 semaphore(%7 : memref<!tpu.dma_semaphore, #tpu.memory_space<semaphore_mem>>) src(%arg1 : memref<2x1024xf32, #tpu.memory_space<any>>) dst(%arg3 : memref<2x1024xf32, #tpu.memory_space<any>>)
    return
  }
}

</mosaic_0001>

<llo_original>
// kernel: tpu_custom_call.1
$region0: #{tpu_custom_call.1}
  #allocation0 [shape = 'u32[]', space=smem, size = 0x4, offset = 0x4, fixed_abs, tag = 'smem constant byte address 0x4 - core index']
  #allocation1 [shape = 'u32[144,128]{1,0:T(1,128)}', space=vmem, size = 0x12000, scoped, tag = 'internal scratch']
  #allocation2 [shape = 's32[2]{0}', space=sflag, size = 0x8, scoped, tag = 'scratch operand']
  #allocation3 [shape = 's32[]', space=sflag, size = 0x4, offset = 0, fixed_abs, tag = 'sflag constant byte address 0x0 - dummy sync flag']
  #allocation4 [shape = 'u32[0]{0}', space=smem, size = 0, offset = 0, fixed_abs, tag = 'smem constant byte address 0x0 - null']
  #allocation5 [shape = 's32[]', space=sflag, size = 0x4, offset = 0, fixed_abs, tag = 'sflag constant byte address 0x0 - dummy sync flag']
  #allocation6 [shape = 'u32[0]{0}', space=smem, size = 0, offset = 0, fixed_abs, tag = 'smem constant byte address 0x0 - null']
  %s0 = inlined_call_operand.hbm [shape: f32[2,1024], index: 0, kind: input, shape index: {}]
  %s1 = inlined_call_operand.hbm [shape: f32[2,1024], index: 1, kind: input, shape index: {}]
  %s2 = inlined_call_operand.hbm [shape: f32[2,1024], index: 2, kind: output, shape index: {0}]
  %s3 = inlined_call_operand.hbm [shape: f32[2,1024], index: 3, kind: output, shape index: {1}]
  %4 = xla_tuple %s2, %s3
  %s5 = sld [smem:[#allocation0]]
  $region2: #{tpu_custom_call.1} parent=0
    _
  %s7 = ssub.s32 1, %s5
  %s8 = scalar_select 0, %s7, %s5
  %s10 = sshll.u32 1, 14
  %s11 = sxor.u32 4294967295, %s10
  %s14 = sshll.u32 3, 24
  %s15 = sxor.u32 4294967295, %s14
  %s16 = sand.u32 0, %s15
  %s18 = sor.u32 %s16, 0
  %21 = dma.general %s0, 256, %s2, [#allocation2], [#allocation3], [#allocation4], %s18, 0
  %s22 = scalar_lea.sflag [#allocation2], 1
  %s24 = sshll.u32 1, 14
  %s25 = sxor.u32 4294967295, %s24
  %s28 = sshll.u32 3, 24
  %s29 = sxor.u32 4294967295, %s28
  %s30 = sand.u32 0, %s29
  %s32 = sor.u32 %s30, 0
  %35 = dma.general %s1, 256, %s3, %s22, [#allocation5], [#allocation6], %s32, 0
  %s36 = smul.u32 2, 1
  %s37 = smul.u32 %s36, 8
  %s38 = sshll.u32 %s37, 4
  %39 = dma.done [#allocation2], %s38
  %s40 = sshll.u32 %s37, 4
  %41 = dma.done %s22, %s40
  %42 = vsyncmov [#allocation2]
  %s43 = vpop.sfrf %42
  %p44 = scmp.eq.s32.totalorder %s43, 0
  %p45 = pneg %p44
  %47 = shalt.err (%p45)
  %s48 = scalar_lea.sflag [#allocation2], 1
  %49 = vsyncmov %s48
  %s50 = vpop.sfrf %49
  %p51 = scmp.eq.s32.totalorder %s50, 0
  %p52 = pneg %p51
  %54 = shalt.err (%p52)

</llo_original>
